<compile_context>
chip_gen: v7x
topology: tpu7x:2x2x1
jax: 0.10.0
libtpu: 0.0.40
codegen_flags: <defaults>
</compile_context>

<pallas_src>
import jax
import jax.numpy as jnp
from jax.experimental import pallas as pl
from jax.experimental.pallas import tpu as pltpu

_SUBLANE = 8
_MAX_BATCH_TILE = 512


def _round_up(x, m):
    return (x + m - 1) // m * m


def _vmem_capacity_bytes():
    try:
        return int(pltpu.get_tpu_info().vmem_capacity_bytes)
    except Exception:
        return 64 * 1024 * 1024  # conservative per-TC figure (v7x)


def _reparam_kernel(x_ref, w_ref, b_ref, eps_ref, z_ref, mu_ref, sigma_ref):
    d = mu_ref.shape[-1]

    # Single fused MXU matmul: (TB, D) @ (D, 2*D) -> (TB, 2*D), f32 accumulate.
    proj = jnp.dot(x_ref[...], w_ref[...], preferred_element_type=jnp.float32)
    proj = proj + b_ref[...]                     # (1, 2*D) broadcast
    mu = proj[:, :d]                             # static slices of the fused result
    sigma = proj[:, d:]

    z = mu + eps_ref[...].astype(jnp.float32) * sigma

    z_ref[...] = z.astype(z_ref.dtype)
    mu_ref[...] = mu.astype(mu_ref.dtype)
    sigma_ref[...] = sigma.astype(sigma_ref.dtype)


def prepare_params(w_mu, b_mu, w_lv, b_lv):
    """One-time parameter prep: PyTorch (out, in) weights -> fused (D, 2*D)
    weight in (in, out) layout and a (1, 2*D) bias.  No padding needed."""
    d = w_mu.shape[0]
    w_cat = jnp.concatenate([w_mu.T, w_lv.T], axis=1)            # (D, 2*D)
    b_cat = jnp.concatenate([b_mu, b_lv]).reshape(1, 2 * d)      # (1, 2*D)
    return w_cat, b_cat


@jax.jit
def reparametrisation_forward(x, w_cat, b_cat, eps):
    """x, eps: (B, D); (w_cat, b_cat) from prepare_params().
    Returns (z, mu, sigma), each (B, D)."""
    b, d = x.shape
    itemsize = jnp.dtype(x.dtype).itemsize

    # Batch tile: prefer >=2 grid steps (v7x megacore) when the batch allows;
    # partial last block is handled by Pallas (grid = cdiv), no batch padding.
    if b <= _SUBLANE:
        tb = b
    else:
        tb = min(_MAX_BATCH_TILE, _round_up(pl.cdiv(b, 2), _SUBLANE))
        tb = min(tb, _round_up(b, _SUBLANE))
    grid = (pl.cdiv(b, tb),)

    act_spec = pl.BlockSpec((tb, d), lambda i: (i, 0))
    w_spec = pl.BlockSpec((d, 2 * d), lambda i: (0, 0))   # resident across steps
    b_spec = pl.BlockSpec((1, 2 * d), lambda i: (0, 0))   # resident across steps
    out_sds = jax.ShapeDtypeStruct((b, d), x.dtype)

    flops = 2 * b * d * (2 * d) + 4 * b * d
    bytes_accessed = itemsize * (5 * b * d) + itemsize * (2 * d * d + 2 * d)

    vmem_need = itemsize * (2 * tb * d          # x, double-buffered
                            + 2 * tb * d        # eps, double-buffered
                            + 3 * 2 * tb * d    # 3 outputs, double-buffered
                            + 2 * d * 2 * d     # fused weight (DMA'd once)
                            + 2 * 2 * d)        # bias
    vmem_limit = int(min(_vmem_capacity_bytes(),
                         max(16 * 1024 * 1024, vmem_need + (4 << 20))))

    z, mu, sigma = pl.pallas_call(
        _reparam_kernel,
        out_shape=(out_sds, out_sds, out_sds),
        grid_spec=pltpu.PrefetchScalarGridSpec(
            num_scalar_prefetch=0,
            grid=grid,
            in_specs=[act_spec, w_spec, b_spec, act_spec],
            out_specs=(act_spec, act_spec, act_spec),
        ),
        compiler_params=pltpu.CompilerParams(
            dimension_semantics=("parallel",),
            vmem_limit_bytes=vmem_limit,
        ),
        cost_estimate=pl.CostEstimate(
            flops=flops, transcendentals=0, bytes_accessed=bytes_accessed),
    )(x, w_cat, b_cat, eps)

    return z, mu, sigma


if __name__ == "__main__":
    batch = 64
    latent_dim = 32

    key = jax.random.PRNGKey(0)
    k_x, k_wm, k_bm, k_wv, k_bv, k_eps = jax.random.split(key, 6)

    # PyTorch nn.Linear shapes: weight (out, in), bias (out,).
    bound = 1.0 / jnp.sqrt(latent_dim)
    w_mu = jax.random.uniform(k_wm, (latent_dim, latent_dim), jnp.float32, -bound, bound)
    b_mu = jax.random.uniform(k_bm, (latent_dim,), jnp.float32, -bound, bound)
    w_lv = jax.random.uniform(k_wv, (latent_dim, latent_dim), jnp.float32, -bound, bound)
    b_lv = jax.random.uniform(k_bv, (latent_dim,), jnp.float32, -bound, bound)

    x = jax.random.normal(k_x, (batch, latent_dim), jnp.float32)
    eps = jax.random.normal(k_eps, (batch, latent_dim), jnp.float32)

    w_cat, b_cat = prepare_params(w_mu, b_mu, w_lv, b_lv)   # one-time setup

    z, mu, sigma = reparametrisation_forward(x, w_cat, b_cat, eps)
    jax.block_until_ready((z, mu, sigma))

    # Exact (to matmul tolerance) check against a plain-JAX reference.
    mu_ref = x @ w_mu.T + b_mu
    sigma_ref = x @ w_lv.T + b_lv
    z_ref = mu_ref + eps * sigma_ref
    assert jnp.allclose(mu, mu_ref, atol=1e-4, rtol=1e-4), "mu mismatch"
    assert jnp.allclose(sigma, sigma_ref, atol=1e-4, rtol=1e-4), "sigma mismatch"
    assert jnp.allclose(z, z_ref, atol=1e-4, rtol=1e-4), "z mismatch"
    assert bool(jnp.all(jnp.isfinite(z))), "z not finite"

    print("KERNEL_OK")
</pallas_src>

<mosaic_0001>
module attributes {stable_mosaic.version = 11 : i64} {
  func.func @_reparam_kernel(%arg0: i32, %arg1: memref<32x32xf32, #tpu.memory_space<vmem>>, %arg2: memref<32x64xf32, #tpu.memory_space<vmem>>, %arg3: memref<1x64xf32, #tpu.memory_space<vmem>>, %arg4: memref<32x32xf32, #tpu.memory_space<vmem>>, %arg5: memref<32x32xf32, #tpu.memory_space<vmem>>, %arg6: memref<32x32xf32, #tpu.memory_space<vmem>>, %arg7: memref<32x32xf32, #tpu.memory_space<vmem>>) attributes {dimension_semantics = [#tpu.dimension_semantics<parallel>], iteration_bounds = array<i64: 2>, scalar_prefetch = 0 : i64, scratch_operands = 0 : i64, tpu.core_type = #tpu.core_type<tc>, window_params = [{transform_indices = @transform_0, window_bounds = array<i64: 32, 32>}, {pipeline_mode = #tpu.pipeline_mode<synchronous>, transform_indices = @transform_1, window_bounds = array<i64: 32, 64>}, {pipeline_mode = #tpu.pipeline_mode<synchronous>, transform_indices = @transform_2, window_bounds = array<i64: 1, 64>}, {transform_indices = @transform_3, window_bounds = array<i64: 32, 32>}, {transform_indices = @transform_4, window_bounds = array<i64: 32, 32>}, {transform_indices = @transform_5, window_bounds = array<i64: 32, 32>}, {transform_indices = @transform_6, window_bounds = array<i64: 32, 32>}]} {
    %c0 = arith.constant 0 : index
    %c0_0 = arith.constant 0 : index
    %0 = vector.load %arg1[%c0, %c0_0] : memref<32x32xf32, #tpu.memory_space<vmem>>, vector<32x32xf32>
    %c0_1 = arith.constant 0 : index
    %c0_2 = arith.constant 0 : index
    %1 = vector.load %arg2[%c0_1, %c0_2] : memref<32x64xf32, #tpu.memory_space<vmem>>, vector<32x64xf32>
    %cst = arith.constant dense<0.000000e+00> : vector<32x64xf32>
    %2 = tpu.matmul %0, %1, %cst {dimension_numbers = #tpu.dot_dimension_numbers<[1], [0], [0], [1], [0, 0, 1, 1], [], []>} : vector<32x32xf32>, vector<32x64xf32>, vector<32x64xf32> -> vector<32x64xf32>
    %c0_3 = arith.constant 0 : index
    %c0_4 = arith.constant 0 : index
    %3 = vector.load %arg3[%c0_3, %c0_4] : memref<1x64xf32, #tpu.memory_space<vmem>>, vector<1x64xf32>
    %4 = vector.broadcast %3 : vector<1x64xf32> to vector<32x64xf32>
    %5 = arith.addf %2, %4 : vector<32x64xf32>
    %6 = vector.extract_strided_slice %5 {offsets = [0, 0], sizes = [32, 32], strides = [1, 1]} : vector<32x64xf32> to vector<32x32xf32>
    %7 = vector.extract_strided_slice %5 {offsets = [0, 32], sizes = [32, 32], strides = [1, 1]} : vector<32x64xf32> to vector<32x32xf32>
    %c0_5 = arith.constant 0 : index
    %c0_6 = arith.constant 0 : index
    %8 = vector.load %arg4[%c0_5, %c0_6] : memref<32x32xf32, #tpu.memory_space<vmem>>, vector<32x32xf32>
    %9 = arith.mulf %8, %7 : vector<32x32xf32>
    %10 = arith.addf %6, %9 : vector<32x32xf32>
    %c0_7 = arith.constant 0 : index
    %c0_8 = arith.constant 0 : index
    %11 = vector.load %arg5[%c0_7, %c0_8] : memref<32x32xf32, #tpu.memory_space<vmem>>, vector<32x32xf32>
    tpu.vector_store %arg5[%c0_7, %c0_8], %10 {strides = array<i32>} : memref<32x32xf32, #tpu.memory_space<vmem>>, vector<32x32xf32>,
    %c0_9 = arith.constant 0 : index
    %c0_10 = arith.constant 0 : index
    %12 = vector.load %arg6[%c0_9, %c0_10] : memref<32x32xf32, #tpu.memory_space<vmem>>, vector<32x32xf32>
    tpu.vector_store %arg6[%c0_9, %c0_10], %6 {strides = array<i32>} : memref<32x32xf32, #tpu.memory_space<vmem>>, vector<32x32xf32>,
    %c0_11 = arith.constant 0 : index
    %c0_12 = arith.constant 0 : index
    %13 = vector.load %arg7[%c0_11, %c0_12] : memref<32x32xf32, #tpu.memory_space<vmem>>, vector<32x32xf32>
    tpu.vector_store %arg7[%c0_11, %c0_12], %7 {strides = array<i32>} : memref<32x32xf32, #tpu.memory_space<vmem>>, vector<32x32xf32>,
    return
  }
  func.func @transform_0(%arg0: i32) -> (i32, i32) {
    %c0_i32 = arith.constant 0 : i32
    %c0_i32_0 = arith.constant 0 : i32
    return %arg0, %c0_i32 : i32, i32
  }
  func.func @transform_1(%arg0: i32) -> (i32, i32) {
    %c0_i32 = arith.constant 0 : i32
    %c0_i32_0 = arith.constant 0 : i32
    %c0_i32_1 = arith.constant 0 : i32
    return %c0_i32, %c0_i32_0 : i32, i32
  }
  func.func @transform_2(%arg0: i32) -> (i32, i32) {
    %c0_i32 = arith.constant 0 : i32
    %c0_i32_0 = arith.constant 0 : i32
    %c0_i32_1 = arith.constant 0 : i32
    return %c0_i32, %c0_i32_0 : i32, i32
  }
  func.func @transform_3(%arg0: i32) -> (i32, i32) {
    %c0_i32 = arith.constant 0 : i32
    %c0_i32_0 = arith.constant 0 : i32
    return %arg0, %c0_i32 : i32, i32
  }
  func.func @transform_4(%arg0: i32) -> (i32, i32) {
    %c0_i32 = arith.constant 0 : i32
    %c0_i32_0 = arith.constant 0 : i32
    return %arg0, %c0_i32 : i32, i32
  }
  func.func @transform_5(%arg0: i32) -> (i32, i32) {
    %c0_i32 = arith.constant 0 : i32
    %c0_i32_0 = arith.constant 0 : i32
    return %arg0, %c0_i32 : i32, i32
  }
  func.func @transform_6(%arg0: i32) -> (i32, i32) {
    %c0_i32 = arith.constant 0 : i32
    %c0_i32_0 = arith.constant 0 : i32
    return %arg0, %c0_i32 : i32, i32
  }
}

</mosaic_0001>

<llo_original>
// kernel: reparametrisation_forward.1
$region0: #{reparametrisation_forward.1}
  #allocation0 [shape = 'u32[]', space=smem, size = 0x4, offset = 0x4, fixed_abs, tag = 'smem constant byte address 0x4 - core index']
  #allocation1 [shape = 'u32[144,128]{1,0:T(1,128)}', space=vmem, size = 0x12000, scoped, tag = 'internal scratch']
  %s0 = inlined_call_operand.vmem [shape: f32[64,32], index: 0, kind: input, shape index: {}]
  %s1 = inlined_call_operand.vmem [shape: f32[32,64], index: 1, kind: input, shape index: {}]
  %s2 = inlined_call_operand.vmem [shape: f32[1,64], index: 2, kind: input, shape index: {}]
  %s3 = inlined_call_operand.vmem [shape: f32[64,32], index: 3, kind: input, shape index: {}]
  %s4 = inlined_call_operand.vmem [shape: f32[64,32], index: 4, kind: output, shape index: {0}]
  %s5 = inlined_call_operand.vmem [shape: f32[64,32], index: 5, kind: output, shape index: {1}]
  %s6 = inlined_call_operand.vmem [shape: f32[64,32], index: 6, kind: output, shape index: {2}]
  %7 = xla_tuple %s4, %s5, %s6
  %s8 = sld [smem:[#allocation0]]
  $region65: #{reparametrisation_forward.1} parent=0
    _
  %s10 = ssub.s32 1, %s8
  %s11 = scalar_select 0, %s10, %s8
  loop: start=0, step=1, limit=4
  $region2: #{reparametrisation_forward.1} parent=0 // loop_pre_header
    _
  $region3: #{reparametrisation_forward.1} parent=0 // loop_header
    %s13 = sphi 0, %s17
    %p14 = scmp.ge.s32.totalorder %s13, 4
    %s23 = sphi 0, %s25
    %s26 = sphi 0, %s23
    %s27 = sphi 0, %s26
    %s43 = sphi 0, %s27
    %s47 = sphi 0, %s47
    %s49 = sphi 0, %s47
    %s50 = sphi 0, %s49
    %s64 = sphi 0, %s50
    %s68 = sphi 0, %s68
    %s70 = sphi 0, %s68
    %s71 = sphi 0, %s70
    %s85 = sphi 0, %s71
    %s91 = sphi 0, %s93
    %s94 = sphi 0, %s91
    %s95 = sphi 0, %s94
    %s111 = sphi 0, %s95
    %s117 = sphi 0, %s119
    %s120 = sphi 0, %s117
    %s121 = sphi 0, %s120
    %s137 = sphi 0, %s121
    %s143 = sphi 0, %s145
    %s146 = sphi 0, %s143
    %s147 = sphi 0, %s146
    %s163 = sphi 0, %s147
    %s169 = sphi 0, %s171
    %s172 = sphi 0, %s169
    %s173 = sphi 0, %s172
    %s189 = sphi 0, %s173
  $region4: #{reparametrisation_forward.1} parent=0 // loop_header_branch
    %16 = sbr.rel (%p14) target = $region8
  $region5: #{reparametrisation_forward.1} parent=0 // loop_body
    %s18 = ssub.s32 %s13, 1
    %s19 = ssub.s32 %s13, 2
    %s20 = sadd.s32 %s13, 1
    %s21 = ssub.s32 %s13, %s20
    %p22 = scmp.eq.s32.totalorder %s21, 0
    %s24 = sadd.s32 %s23, 1
    %s25 = scalar_select %p22, %s23, %s24
    %p28 = pneg %p22
    %p29 = scmp.eq.s32.totalorder %s13, 1
    %p30 = por %p28, %p29
    %p31 = scmp.ne.s32.totalorder %s23, %s26
    %p32 = scmp.eq.s32.totalorder %s13, 0
    %p33 = por %p31, %p32
    %p34 = scmp.ne.s32.totalorder %s23, %s26
    %p35 = scmp.eq.s32.totalorder %s18, 1
    %p36 = por %p34, %p35
    %p37 = scmp.ne.s32.totalorder %s26, %s27
    %p38 = scmp.eq.s32.totalorder %s18, 0
    %p39 = por %p37, %p38
    %p40 = scmp.ne.s32.totalorder %s26, %s27
    %p41 = scmp.eq.s32.totalorder %s19, 1
    %p42 = por %p40, %p41
    %p44 = scmp.ne.s32.totalorder %s27, %s43
    %p45 = scmp.eq.s32.totalorder %s19, 0
    %p46 = por %p44, %p45
    %s48 = sadd.s32 %s47, 1
    %p51 = scmp.eq.s32.totalorder %s13, 1
    %p52 = scmp.ne.s32.totalorder %s47, %s49
    %p53 = scmp.eq.s32.totalorder %s13, 0
    %p54 = por %p52, %p53
    %p55 = scmp.ne.s32.totalorder %s47, %s49
    %p56 = scmp.eq.s32.totalorder %s18, 1
    %p57 = por %p55, %p56
    %p58 = scmp.ne.s32.totalorder %s49, %s50
    %p59 = scmp.eq.s32.totalorder %s18, 0
    %p60 = por %p58, %p59
    %p61 = scmp.ne.s32.totalorder %s49, %s50
    %p62 = scmp.eq.s32.totalorder %s19, 1
    %p63 = por %p61, %p62
    %p65 = scmp.ne.s32.totalorder %s50, %s64
    %p66 = scmp.eq.s32.totalorder %s19, 0
    %p67 = por %p65, %p66
    %s69 = sadd.s32 %s68, 1
    %p72 = scmp.eq.s32.totalorder %s13, 1
    %p73 = scmp.ne.s32.totalorder %s68, %s70
    %p74 = scmp.eq.s32.totalorder %s13, 0
    %p75 = por %p73, %p74
    %p76 = scmp.ne.s32.totalorder %s68, %s70
    %p77 = scmp.eq.s32.totalorder %s18, 1
    %p78 = por %p76, %p77
    %p79 = scmp.ne.s32.totalorder %s70, %s71
    %p80 = scmp.eq.s32.totalorder %s18, 0
    %p81 = por %p79, %p80
    %p82 = scmp.ne.s32.totalorder %s70, %s71
    %p83 = scmp.eq.s32.totalorder %s19, 1
    %p84 = por %p82, %p83
    %p86 = scmp.ne.s32.totalorder %s71, %s85
    %p87 = scmp.eq.s32.totalorder %s19, 0
    %p88 = por %p86, %p87
    %s89 = ssub.s32 %s13, %s20
    %p90 = scmp.eq.s32.totalorder %s89, 0
    %s92 = sadd.s32 %s91, 1
    %s93 = scalar_select %p90, %s91, %s92
    %p96 = pneg %p90
    %p97 = scmp.eq.s32.totalorder %s13, 1
    %p98 = por %p96, %p97
    %p99 = scmp.ne.s32.totalorder %s91, %s94
    %p100 = scmp.eq.s32.totalorder %s13, 0
    %p101 = por %p99, %p100
    %p102 = scmp.ne.s32.totalorder %s91, %s94
    %p103 = scmp.eq.s32.totalorder %s18, 1
    %p104 = por %p102, %p103
    %p105 = scmp.ne.s32.totalorder %s94, %s95
    %p106 = scmp.eq.s32.totalorder %s18, 0
    %p107 = por %p105, %p106
    %p108 = scmp.ne.s32.totalorder %s94, %s95
    %p109 = scmp.eq.s32.totalorder %s19, 1
    %p110 = por %p108, %p109
    %p112 = scmp.ne.s32.totalorder %s95, %s111
    %p113 = scmp.eq.s32.totalorder %s19, 0
    %p114 = por %p112, %p113
    %s115 = ssub.s32 %s13, %s20
    %p116 = scmp.eq.s32.totalorder %s115, 0
    %s118 = sadd.s32 %s117, 1
    %s119 = scalar_select %p116, %s117, %s118
    %p122 = pneg %p116
    %p123 = scmp.eq.s32.totalorder %s13, 1
    %p124 = por %p122, %p123
    %p125 = scmp.ne.s32.totalorder %s117, %s120
    %p126 = scmp.eq.s32.totalorder %s13, 0
    %p127 = por %p125, %p126
    %p128 = scmp.ne.s32.totalorder %s117, %s120
    %p129 = scmp.eq.s32.totalorder %s18, 1
    %p130 = por %p128, %p129
    %p131 = scmp.ne.s32.totalorder %s120, %s121
    %p132 = scmp.eq.s32.totalorder %s18, 0
    %p133 = por %p131, %p132
    %p134 = scmp.ne.s32.totalorder %s120, %s121
    %p135 = scmp.eq.s32.totalorder %s19, 1
    %p136 = por %p134, %p135
    %p138 = scmp.ne.s32.totalorder %s121, %s137
    %p139 = scmp.eq.s32.totalorder %s19, 0
    %p140 = por %p138, %p139
    %s141 = ssub.s32 %s13, %s20
    %p142 = scmp.eq.s32.totalorder %s141, 0
    %s144 = sadd.s32 %s143, 1
    %s145 = scalar_select %p142, %s143, %s144
    %p148 = pneg %p142
    %p149 = scmp.eq.s32.totalorder %s13, 1
    %p150 = por %p148, %p149
    %p151 = scmp.ne.s32.totalorder %s143, %s146
    %p152 = scmp.eq.s32.totalorder %s13, 0
    %p153 = por %p151, %p152
    %p154 = scmp.ne.s32.totalorder %s143, %s146
    %p155 = scmp.eq.s32.totalorder %s18, 1
    %p156 = por %p154, %p155
    %p157 = scmp.ne.s32.totalorder %s146, %s147
    %p158 = scmp.eq.s32.totalorder %s18, 0
    %p159 = por %p157, %p158
    %p160 = scmp.ne.s32.totalorder %s146, %s147
    %p161 = scmp.eq.s32.totalorder %s19, 1
    %p162 = por %p160, %p161
    %p164 = scmp.ne.s32.totalorder %s147, %s163
    %p165 = scmp.eq.s32.totalorder %s19, 0
    %p166 = por %p164, %p165
    %s167 = ssub.s32 %s13, %s20
    %p168 = scmp.eq.s32.totalorder %s167, 0
    %s170 = sadd.s32 %s169, 1
    %s171 = scalar_select %p168, %s169, %s170
    %p174 = pneg %p168
    %p175 = scmp.eq.s32.totalorder %s13, 1
    %p176 = por %p174, %p175
    %p177 = scmp.ne.s32.totalorder %s169, %s172
    %p178 = scmp.eq.s32.totalorder %s13, 0
    %p179 = por %p177, %p178
    %p180 = scmp.ne.s32.totalorder %s169, %s172
    %p181 = scmp.eq.s32.totalorder %s18, 1
    %p182 = por %p180, %p181
    %p183 = scmp.ne.s32.totalorder %s172, %s173
    %p184 = scmp.eq.s32.totalorder %s18, 0
    %p185 = por %p183, %p184
    %p186 = scmp.ne.s32.totalorder %s172, %s173
    %p187 = scmp.eq.s32.totalorder %s19, 1
    %p188 = por %p186, %p187
    %p190 = scmp.ne.s32.totalorder %s173, %s189
    %p191 = scmp.eq.s32.totalorder %s19, 0
    %p192 = por %p190, %p191
    %p193 = scmp.le.s32.totalorder 1, %s13
    %p194 = scmp.lt.s32.totalorder %s13, 3
    %p195 = pnand %p193, %p194
    %p196 = pneg %p195
    // Predicated region
    $region9: #{reparametrisation_forward.1} parent=5 // pred_check
      _
    $region10: #{reparametrisation_forward.1} parent=5 // pred_check_branch
      %198 = sbr.rel (%p195) target = $region12
    $region11: #{reparametrisation_forward.1} parent=5 // pred_region
      %s199 = ssub.s32 %s13, 1
      // Predicated region
      $region13: #{reparametrisation_forward.1} parent=11 // pred_check
        %p200 = pneg %p60
      $region14: #{reparametrisation_forward.1} parent=11 // pred_check_branch
        %202 = sbr.rel (%p200) target = $region16
      $region15: #{reparametrisation_forward.1} parent=11 // pred_region
        _
      $region16: #{reparametrisation_forward.1} parent=11 // pred_fallthru
        _
      // Predicated region
      $region17: #{reparametrisation_forward.1} parent=11 // pred_check
        %p203 = pneg %p81
      $region18: #{reparametrisation_forward.1} parent=11 // pred_check_branch
        %205 = sbr.rel (%p203) target = $region20
      $region19: #{reparametrisation_forward.1} parent=11 // pred_region
        _
      $region20: #{reparametrisation_forward.1} parent=11 // pred_fallthru
        _
    $region12: #{reparametrisation_forward.1} parent=5 // pred_fallthru
      _
    %p206 = scmp.lt.s32.totalorder %s13, 2
    // Predicated region
    $region21: #{reparametrisation_forward.1} parent=5 // pred_check
      %p207 = pneg %p206
    $region22: #{reparametrisation_forward.1} parent=5 // pred_check_branch
      %209 = sbr.rel (%p207) target = $region24
    $region23: #{reparametrisation_forward.1} parent=5 // pred_region
      // Predicated region
      $region25: #{reparametrisation_forward.1} parent=23 // pred_check
        %p210 = pneg %p33
      $region26: #{reparametrisation_forward.1} parent=23 // pred_check_branch
        %212 = sbr.rel (%p210) target = $region28
      $region27: #{reparametrisation_forward.1} parent=23 // pred_region
        %s213 = smul.u32 4, %s13
        %p214 = scmp.lt.s32.totalorder %s213, 7
        %s215 = scalar_select %p214, %s213, 7
        %s216 = smul.addr %s215, 8
        %s217 = scalar_lea.vmem %s0, %s216
        %s218 = smul.u32 4, %s13
      $region28: #{reparametrisation_forward.1} parent=23 // pred_fallthru
        _
      // Predicated region
      $region29: #{reparametrisation_forward.1} parent=23 // pred_check
        %p219 = pneg %p101
      $region30: #{reparametrisation_forward.1} parent=23 // pred_check_branch
        %221 = sbr.rel (%p219) target = $region32
      $region31: #{reparametrisation_forward.1} parent=23 // pred_region
        %s222 = smul.u32 4, %s13
        %p223 = scmp.lt.s32.totalorder %s222, 7
        %s224 = scalar_select %p223, %s222, 7
        %s225 = smul.addr %s224, 8
        %s226 = scalar_lea.vmem %s3, %s225
        %s227 = smul.u32 4, %s13
      $region32: #{reparametrisation_forward.1} parent=23 // pred_fallthru
        _
    $region24: #{reparametrisation_forward.1} parent=5 // pred_fallthru
      _
    %p228 = scmp.le.s32.totalorder 1, %s13
    %p229 = scmp.lt.s32.totalorder %s13, 3
    %p230 = pnand %p228, %p229
    %p231 = pneg %p230
    // Predicated region
    $region33: #{reparametrisation_forward.1} parent=5 // pred_check
      _
    $region34: #{reparametrisation_forward.1} parent=5 // pred_check_branch
      %233 = sbr.rel (%p230) target = $region36
    $region35: #{reparametrisation_forward.1} parent=5 // pred_region
      %s234 = ssub.s32 %s13, 1
      %s235 = smul.u32 4, %s18
      %p236 = scmp.lt.s32.totalorder %s235, 7
      %s237 = scalar_select %p236, %s235, 7
      %s238 = smul.addr %s237, 8
      %s239 = scalar_lea.vmem %s0, %s238
      %p240 = pneg %p39
      %p241 = pneg %p36
      %p242 = pneg %p60
      %p243 = pneg %p57
      %p244 = pneg %p81
      %p245 = pneg %p78
      %s246 = smul.u32 4, %s18
      %p247 = scmp.lt.s32.totalorder %s246, 7
      %s248 = scalar_select %p247, %s246, 7
      %s249 = smul.addr %s248, 8
      %s250 = scalar_lea.vmem %s3, %s249
      %p251 = pneg %p107
      %p252 = pneg %p104
      %p253 = pneg %p133
      %p254 = pneg %p130
      %s255 = smul.u32 4, %s18
      %p256 = scmp.lt.s32.totalorder %s255, 7
      %s257 = scalar_select %p256, %s255, 7
      %s258 = smul.addr %s257, 8
      %s259 = scalar_lea.vmem %s4, %s258
      %p260 = pneg %p159
      %p261 = pneg %p156
      %s262 = smul.u32 4, %s18
      %p263 = scmp.lt.s32.totalorder %s262, 7
      %s264 = scalar_select %p263, %s262, 7
      %s265 = smul.addr %s264, 8
      %s266 = scalar_lea.vmem %s5, %s265
      %p267 = pneg %p185
      %p268 = pneg %p182
      %s269 = smul.u32 4, %s18
      %p270 = scmp.lt.s32.totalorder %s269, 7
      %s271 = scalar_select %p270, %s269, 7
      %s272 = smul.addr %s271, 8
      %s273 = scalar_lea.vmem %s6, %s272
      %s274 = smul.u32 4, %s18
      %p275 = scmp.lt.s32.totalorder %s274, 7
      %s276 = scalar_select %p275, %s274, 7
      %s277 = smul.addr %s276, 8
      %s278 = scalar_lea.vmem %s0, %s277
      %s279 = smul.u32 4, %s18
      %s280 = smul.u32 4, %s18
      %p281 = scmp.lt.s32.totalorder %s280, 7
      %s282 = scalar_select %p281, %s280, 7
      %s283 = smul.addr %s282, 8
      %s284 = scalar_lea.vmem %s3, %s283
      %s285 = smul.u32 4, %s18
      %s286 = smul.u32 4, %s18
      %p287 = scmp.lt.s32.totalorder %s286, 7
      %s288 = scalar_select %p287, %s286, 7
      %s289 = smul.addr %s288, 8
      %s290 = scalar_lea.vmem %s4, %s289
      %s291 = smul.u32 4, %s18
      %s292 = smul.u32 4, %s18
      %p293 = scmp.lt.s32.totalorder %s292, 7
      %s294 = scalar_select %p293, %s292, 7
      %s295 = smul.addr %s294, 8
      %s296 = scalar_lea.vmem %s5, %s295
      %s297 = smul.u32 4, %s18
      %s298 = smul.u32 4, %s18
      %p299 = scmp.lt.s32.totalorder %s298, 7
      %s300 = scalar_select %p299, %s298, 7
      %s301 = smul.addr %s300, 8
      %s302 = scalar_lea.vmem %s6, %s301
      %s303 = smul.u32 4, %s18
      %v304 = vld [vmem:[%s278] sm:$0xff]
      %v305 = vld [vmem:[%s278 + $0x8] sm:$0xff]
      %v306 = vld [vmem:[%s278 + $0x10] sm:$0xff]
      %v307 = vld [vmem:[%s278 + $0x18] sm:$0xff]
      %v308 = vld [vmem:[%s1] sm:$0xff]
      %v309 = vld [vmem:[%s1 + $0x8] sm:$0xff]
      %v310 = vld [vmem:[%s1 + $0x10] sm:$0xff]
      %v311 = vld [vmem:[%s1 + $0x18] sm:$0xff]
      %v312 = vld [vmem:[%s2] sm:$0x1]
      %v314 = vlaneseq
      %v315 = vshrl.u32 %v314, 7
      %v316 = vsub.s32 0, %v315
      %v317 = vrot.slane %v312, %v316
      %vm319 = vcmask 261120
      %v321 = vsel %vm319, %v304, 0
      %v324 = vsel %vm319, %v305, 0
      %v327 = vsel %vm319, %v306, 0
      %v330 = vsel %vm319, %v307, 0
      %332 = vmatprep.subr.mxu0 0.0
      %333 = vmatpush1.msra.mxu0 %v308
      %334 = vmatprep.subr.mxu0 0.0
      %335 = vmatpush1.msra.mxu0 %v309
      %336 = vmatprep.subr.mxu0 0.0
      %337 = vmatpush1.msra.mxu0 %v310
      %338 = vmatprep.subr.mxu0 0.0
      %339 = vmatpush1.msra.mxu0 %v311
      %340 = vmatprep.subr.mxu0 0.0
      %341 = vmatpush1.msra.mxu0 0.0
      %342 = vmatprep.subr.mxu0 0.0
      %343 = vmatpush1.msra.mxu0 0.0
      %344 = vmatprep.subr.mxu0 0.0
      %345 = vmatpush1.msra.mxu0 0.0
      %346 = vmatprep.subr.mxu0 0.0
      %347 = vmatpush1.msra.mxu0 0.0
      %348 = vmatprep.subr.mxu0 0.0
      %349 = vmatpush1.msra.mxu0 0.0
      %350 = vmatprep.subr.mxu0 0.0
      %351 = vmatpush1.msra.mxu0 0.0
      %352 = vmatprep.subr.mxu0 0.0
      %353 = vmatpush1.msra.mxu0 0.0
      %354 = vmatprep.subr.mxu0 0.0
      %355 = vmatpush1.msra.mxu0 0.0
      %356 = vmatprep.subr.mxu0 0.0
      %357 = vmatpush1.msra.mxu0 0.0
      %358 = vmatprep.subr.mxu0 0.0
      %359 = vmatpush1.msra.mxu0 0.0
      %360 = vmatprep.subr.mxu0 0.0
      %361 = vmatpush1.msra.mxu0 0.0
      %362 = vmatprep.subr.mxu0 0.0
      %363 = vmatpush1.msra.mxu0 0.0
      %364 = vmatprep.subr.mxu0 0.0
      %365 = vmatpush1.msra.mxu0 0.0
      %366 = vmatprep.subr.mxu0 0.0
      %367 = vmatpush1.msra.mxu0 0.0
      %368 = vmatprep.subr.mxu0 0.0
      %369 = vmatpush1.msra.mxu0 0.0
      %370 = vmatprep.subr.mxu0 0.0
      %371 = vmatpush1.msra.mxu0 0.0
      %372 = vmatprep.subr.mxu0 0.0
      %373 = vmatpush1.msra.mxu0 0.0
      %374 = vmatprep.subr.mxu0 0.0
      %375 = vmatpush1.msra.mxu0 0.0
      %376 = vmatprep.subr.mxu0 0.0
      %377 = vmatpush1.msra.mxu0 0.0
      %378 = vmatprep.subr.mxu0 0.0
      %379 = vmatpush1.msra.mxu0 0.0
      %380 = vmatprep.subr.mxu0 0.0
      %381 = vmatpush1.msra.mxu0 0.0
      %382 = vmatprep.subr.mxu0 0.0
      %383 = vmatpush1.msra.mxu0 0.0
      %384 = vmatprep.subr.mxu0 0.0
      %385 = vmatpush1.msra.mxu0 0.0
      %386 = vmatprep.subr.mxu0 0.0
      %387 = vmatpush1.msra.mxu0 0.0
      %388 = vmatprep.subr.mxu0 0.0
      %389 = vmatpush1.msra.mxu0 0.0
      %390 = vmatprep.subr.mxu0 0.0
      %391 = vmatpush1.msra.mxu0 0.0
      %392 = vmatprep.subr.mxu0 0.0
      %393 = vmatpush1.msra.mxu0 0.0
      %394 = vmatprep.subr.mxu0 0.0
      %395 = vmatpush1.msra.mxu0 0.0
      %396 = vmatprep.mubr.f32.mxu0 0.0
      %397 = vmatmul.mubr.f32.gmra.mrb[0].mxu0 %v321
      %v398 = vpop.f32.mrb[0].mxu0
      %v399 = vadd.f32 %v317, %v398
      %v400 = vpop.f32.mrb[0].mxu0
      %401 = vmatprep.mubr.f32.mxu0 0.0
      %402 = vmatmul.mubr.f32.gmra.mrb[0].mxu0 %v324
      %v403 = vpop.f32.mrb[0].mxu0
      %v404 = vadd.f32 %v317, %v403
      %v405 = vpop.f32.mrb[0].mxu0
      %406 = vmatprep.mubr.f32.mxu0 0.0
      %407 = vmatmul.mubr.f32.gmra.mrb[0].mxu0 %v327
      %v408 = vpop.f32.mrb[0].mxu0
      %v409 = vadd.f32 %v317, %v408
      %v410 = vpop.f32.mrb[0].mxu0
      %411 = vmatprep.mubr.f32.mxu0 0.0
      %412 = vmatmul.mubr.f32.gmra.mrb[0].mxu0 %v330
      %v413 = vpop.f32.mrb[0].mxu0
      %v414 = vadd.f32 %v317, %v413
      %v415 = vpop.f32.mrb[0].mxu0
      %416 = vdwg.mxu0
      %v417 = vld [vmem:[%s284] sm:$0xff]
      %v418 = vld [vmem:[%s284 + $0x8] sm:$0xff]
      %v419 = vld [vmem:[%s284 + $0x10] sm:$0xff]
      %v420 = vld [vmem:[%s284 + $0x18] sm:$0xff]
      %425 = vrot.lane.b32.xlu0 %v399, 96
      %v426 = vpop.permute.xlu0 %425
      %427 = vrot.lane.b32.xlu0 %v404, 96
      %v428 = vpop.permute.xlu0 %427
      %429 = vrot.lane.b32.xlu0 %v409, 96
      %v430 = vpop.permute.xlu0 %429
      %431 = vrot.lane.b32.xlu0 %v414, 96
      %v432 = vpop.permute.xlu0 %431
      %v437 = vmul.f32 %v417, %v426
      %v438 = vmul.f32 %v418, %v428
      %v439 = vmul.f32 %v419, %v430
      %v440 = vmul.f32 %v420, %v432
      %v441 = vadd.f32 %v399, %v437
      %v442 = vadd.f32 %v404, %v438
      %v443 = vadd.f32 %v409, %v439
      %v444 = vadd.f32 %v414, %v440
      %445 = vst.msk [vmem:[%s290] sm:$0xff] %vm319, %v441
      %446 = vst.msk [vmem:[%s290 + $0x8] sm:$0xff] %vm319, %v442
      %447 = vst.msk [vmem:[%s290 + $0x10] sm:$0xff] %vm319, %v443
      %448 = vst.msk [vmem:[%s290 + $0x18] sm:$0xff] %vm319, %v444
      %449 = vst.msk [vmem:[%s296] sm:$0xff] %vm319, %v399
      %450 = vst.msk [vmem:[%s296 + $0x8] sm:$0xff] %vm319, %v404
      %451 = vst.msk [vmem:[%s296 + $0x10] sm:$0xff] %vm319, %v409
      %452 = vst.msk [vmem:[%s296 + $0x18] sm:$0xff] %vm319, %v414
      %453 = vst.msk [vmem:[%s302] sm:$0xff] %vm319, %v426
      %454 = vst.msk [vmem:[%s302 + $0x8] sm:$0xff] %vm319, %v428
      %455 = vst.msk [vmem:[%s302 + $0x10] sm:$0xff] %vm319, %v430
      %456 = vst.msk [vmem:[%s302 + $0x18] sm:$0xff] %vm319, %v432
      %s457 = smul.u32 4, %s18
      %p458 = scmp.lt.s32.totalorder %s457, 7
      %s459 = scalar_select %p458, %s457, 7
      %s460 = smul.addr %s459, 8
      %s461 = scalar_lea.vmem %s4, %s460
      %s462 = smul.u32 4, %s18
      %p463 = scmp.lt.s32.totalorder %s462, 7
      %s464 = scalar_select %p463, %s462, 7
      %s465 = smul.addr %s464, 8
      %s466 = scalar_lea.vmem %s5, %s465
      %s467 = smul.u32 4, %s18
      %p468 = scmp.lt.s32.totalorder %s467, 7
      %s469 = scalar_select %p468, %s467, 7
      %s470 = smul.addr %s469, 8
      %s471 = scalar_lea.vmem %s6, %s470
      // Predicated region
      $region37: #{reparametrisation_forward.1} parent=35 // pred_check
        %p472 = pneg %p130
      $region38: #{reparametrisation_forward.1} parent=35 // pred_check_branch
        %474 = sbr.rel (%p472) target = $region40
      $region39: #{reparametrisation_forward.1} parent=35 // pred_region
        %s475 = smul.u32 4, %s18
      $region40: #{reparametrisation_forward.1} parent=35 // pred_fallthru
        _
      // Predicated region
      $region41: #{reparametrisation_forward.1} parent=35 // pred_check
        %p476 = pneg %p156
      $region42: #{reparametrisation_forward.1} parent=35 // pred_check_branch
        %478 = sbr.rel (%p476) target = $region44
      $region43: #{reparametrisation_forward.1} parent=35 // pred_region
        %s479 = smul.u32 4, %s18
      $region44: #{reparametrisation_forward.1} parent=35 // pred_fallthru
        _
      // Predicated region
      $region45: #{reparametrisation_forward.1} parent=35 // pred_check
        %p480 = pneg %p182
      $region46: #{reparametrisation_forward.1} parent=35 // pred_check_branch
        %482 = sbr.rel (%p480) target = $region48
      $region47: #{reparametrisation_forward.1} parent=35 // pred_region
        %s483 = smul.u32 4, %s18
      $region48: #{reparametrisation_forward.1} parent=35 // pred_fallthru
        _
    $region36: #{reparametrisation_forward.1} parent=5 // pred_fallthru
      _
    %p484 = scmp.le.s32.totalorder 2, %s13
    // Predicated region
    $region49: #{reparametrisation_forward.1} parent=5 // pred_check
      %p485 = pneg %p484
    $region50: #{reparametrisation_forward.1} parent=5 // pred_check_branch
      %487 = sbr.rel (%p485) target = $region52
    $region51: #{reparametrisation_forward.1} parent=5 // pred_region
      %s488 = ssub.s32 %s13, 2
      // Predicated region
      $region53: #{reparametrisation_forward.1} parent=51 // pred_check
        %p489 = pneg %p136
      $region54: #{reparametrisation_forward.1} parent=51 // pred_check_branch
        %491 = sbr.rel (%p489) target = $region56
      $region55: #{reparametrisation_forward.1} parent=51 // pred_region
        %s492 = smul.u32 4, %s19
        %p493 = scmp.lt.s32.totalorder %s492, 7
        %s494 = scalar_select %p493, %s492, 7
        %s495 = smul.addr %s494, 8
        %s496 = scalar_lea.vmem %s4, %s495
      $region56: #{reparametrisation_forward.1} parent=51 // pred_fallthru
        _
      // Predicated region
      $region57: #{reparametrisation_forward.1} parent=51 // pred_check
        %p497 = pneg %p162
      $region58: #{reparametrisation_forward.1} parent=51 // pred_check_branch
        %499 = sbr.rel (%p497) target = $region60
      $region59: #{reparametrisation_forward.1} parent=51 // pred_region
        %s500 = smul.u32 4, %s19
        %p501 = scmp.lt.s32.totalorder %s500, 7
        %s502 = scalar_select %p501, %s500, 7
        %s503 = smul.addr %s502, 8
        %s504 = scalar_lea.vmem %s5, %s503
      $region60: #{reparametrisation_forward.1} parent=51 // pred_fallthru
        _
      // Predicated region
      $region61: #{reparametrisation_forward.1} parent=51 // pred_check
        %p505 = pneg %p188
      $region62: #{reparametrisation_forward.1} parent=51 // pred_check_branch
        %507 = sbr.rel (%p505) target = $region64
      $region63: #{reparametrisation_forward.1} parent=51 // pred_region
        %s508 = smul.u32 4, %s19
        %p509 = scmp.lt.s32.totalorder %s508, 7
        %s510 = scalar_select %p509, %s508, 7
        %s511 = smul.addr %s510, 8
        %s512 = scalar_lea.vmem %s6, %s511
      $region64: #{reparametrisation_forward.1} parent=51 // pred_fallthru
        _
    $region52: #{reparametrisation_forward.1} parent=5 // pred_fallthru
      _
  $region6: #{reparametrisation_forward.1} parent=0 // loop_footer
    %s17 = sadd.s32 1, %s13
  $region7: #{reparametrisation_forward.1} parent=0 // loop_footer_branch
    %12 = sbr.rel target = $region3
  $region8: #{reparametrisation_forward.1} parent=0 // loop_exit
    _

</llo_original>
